<compile_context>
chip_gen: v6e
topology: v6e:2x2x1
jax: 0.10.0
libtpu: 0.0.40
codegen_flags: <defaults>
</compile_context>

<pallas_src>
import functools

import jax
import jax.numpy as jnp
from jax.experimental import pallas as pl
from jax.experimental.pallas import tpu as pltpu


def _round_up(x, m):
    return ((x + m - 1) // m) * m


def _fused_gru_kernel(x_ref, wg_ref, bg_ref, wy_ref, by_ref, out_ref, cur_ref, *, p):
    """Grid = (batch_tiles, num_layers). One layer (fused gates) per inner step;
    output projection folded into the last layer step."""
    l = pl.program_id(1)

    @pl.when(l == 0)
    def _():
        cur_ref[...] = x_ref[...]

    x = cur_ref[...]
    # Single fused gate matmul: (bt, P) @ (P, 2P) -> (bt, 2P), bf16 in / f32 acc.
    pre = (
        jnp.dot(x.astype(jnp.bfloat16), wg_ref[...], preferred_element_type=jnp.float32)
        + bg_ref[...]
    )
    z_pre = pre[:, :p]
    h_pre = pre[:, p:]
    # (1 - sigmoid(a)) == sigmoid(-a); the z_t*hidden term is exactly zero
    # because the reference re-zeros the hidden state every call.
    h = jax.nn.sigmoid(-z_pre) * jnp.tanh(h_pre)
    cur_ref[...] = h

    @pl.when(l == pl.num_programs(1) - 1)
    def _():
        out_ref[...] = (
            jnp.dot(h.astype(jnp.bfloat16), wy_ref[...], preferred_element_type=jnp.float32)
            + by_ref[...]
        ).astype(out_ref.dtype)


def gated_recurrent_forward(params, x):
    """Fused multi-layer forward. x: (B, input_size) f32."""
    layers = params["layers"]
    num_layers = len(layers)
    B, d_in0 = x.shape
    H = layers[0]["w_xz"].shape[1]
    O = params["w_hy"].shape[1]

    # Lane-dense padded feature widths (multiples of 128) and sublane-padded batch.
    P = _round_up(max(d_in0, H), 128)
    Op = _round_up(O, 128)
    Bp = _round_up(B, 8)
    bt = Bp          # one batch tile at these sizes; axis kept "parallel" for v7x scaling
    nb = Bp // bt

    # Stack + zero-pad per-layer gate weights/biases:  W_gates[l] = [w_xz | w_xh].
    w_gates = jnp.zeros((num_layers, P, 2 * P), jnp.float32)
    b_gates = jnp.zeros((num_layers, 1, 2 * P), jnp.float32)
    for l, layer in enumerate(layers):
        d_in = layer["w_xz"].shape[0]
        w_gates = w_gates.at[l, :d_in, :H].set(layer["w_xz"])
        w_gates = w_gates.at[l, :d_in, P:P + H].set(layer["w_xh"])
        b_gates = b_gates.at[l, 0, :H].set(layer["b_z"])
        b_gates = b_gates.at[l, 0, P:P + H].set(layer["b_h"])
    w_gates = w_gates.astype(jnp.bfloat16)            # native MXU rate, half the DMA bytes

    w_hy = (
        jnp.zeros((P, Op), jnp.float32).at[:H, :O].set(params["w_hy"]).astype(jnp.bfloat16)
    )
    b_y = jnp.zeros((1, Op), jnp.float32).at[0, :O].set(params["b_y"])

    x_pad = jnp.zeros((Bp, P), jnp.float32).at[:B, :d_in0].set(x)

    kernel = functools.partial(_fused_gru_kernel, p=P)

    flops = 2 * Bp * P * (2 * P) * num_layers + 2 * Bp * P * Op
    transcendentals = 2 * Bp * P * num_layers
    bytes_accessed = (
        w_gates.size * 2 + b_gates.size * 4 + w_hy.size * 2 + b_y.size * 4
        + x_pad.size * 4 + Bp * Op * 4
    )

    out = pl.pallas_call(
        kernel,
        out_shape=jax.ShapeDtypeStruct((Bp, Op), jnp.float32),
        grid_spec=pltpu.PrefetchScalarGridSpec(
            num_scalar_prefetch=0,
            grid=(nb, num_layers),
            in_specs=[
                pl.BlockSpec((bt, P), lambda b, l: (b, 0)),            # x (read at l==0)
                pl.BlockSpec((None, P, 2 * P), lambda b, l: (l, 0, 0)),  # stacked gate weights
                pl.BlockSpec((None, 1, 2 * P), lambda b, l: (l, 0, 0)),  # stacked gate biases
                pl.BlockSpec((P, Op), lambda b, l: (0, 0)),            # w_hy (used at last l)
                pl.BlockSpec((1, Op), lambda b, l: (0, 0)),            # b_y
            ],
            out_specs=pl.BlockSpec((bt, Op), lambda b, l: (b, 0)),
            scratch_shapes=[pltpu.VMEM((bt, P), jnp.float32)],          # persistent `cur`
        ),
        compiler_params=pltpu.CompilerParams(
            dimension_semantics=("parallel", "arbitrary")
        ),
        cost_estimate=pl.CostEstimate(
            flops=flops, transcendentals=transcendentals, bytes_accessed=bytes_accessed
        ),
    )(x_pad, w_gates, b_gates, w_hy, b_y)

    return out[:B, :O]
    # TODO(synk): if hidden_size is scaled to >=4k on v7x (64 MiB VMEM), add a K-reduction
    # grid axis + vmem_limit_bytes instead of keeping whole (P, 2P) weight blocks resident.


def init_params(key, input_size, hidden_size, output_size, num_layers):
    """Deterministic synthetic init matching the module's parameter shapes."""
    params = {"layers": []}
    for i in range(num_layers):
        d_in = input_size if i == 0 else hidden_size
        key, k1, k2, k3 = jax.random.split(key, 4)
        scale = (2.0 / (d_in + hidden_size)) ** 0.5
        layer = {
            "w_xz": jax.random.normal(k1, (d_in, hidden_size), jnp.float32) * scale,
            "w_xr": jax.random.normal(k2, (d_in, hidden_size), jnp.float32) * scale,
            "w_xh": jax.random.normal(k3, (d_in, hidden_size), jnp.float32) * scale,
            # Recurrent weights exist in the module but never touch the output
            # (hidden is zeroed every forward); kept only for shape fidelity.
            "w_hz": jnp.eye(hidden_size, dtype=jnp.float32),
            "w_hr": jnp.eye(hidden_size, dtype=jnp.float32),
            "w_hh": jnp.eye(hidden_size, dtype=jnp.float32),
            "b_z": jnp.zeros((hidden_size,), jnp.float32),
            "b_r": jnp.ones((hidden_size,), jnp.float32),
            "b_h": jnp.zeros((hidden_size,), jnp.float32),
        }
        params["layers"].append(layer)
    key, ko = jax.random.split(key)
    params["w_hy"] = jax.random.normal(ko, (hidden_size, output_size), jnp.float32) * (
        2.0 / (hidden_size + output_size)
    ) ** 0.5
    params["b_y"] = jnp.zeros((output_size,), jnp.float32)
    return params


def reference_forward(params, x):
    """Pure-JAX f32 reference mirroring the PyTorch forward exactly (zeroed hidden)."""
    cur = x
    B = x.shape[0]
    for layer in params["layers"]:
        H = layer["w_xz"].shape[1]
        hidden = jnp.zeros((B, H), x.dtype)
        z = jax.nn.sigmoid(cur @ layer["w_xz"] + hidden @ layer["w_hz"] + layer["b_z"])
        r = jax.nn.sigmoid(cur @ layer["w_xr"] + hidden @ layer["w_hr"] + layer["b_r"])
        h_tilde = jnp.tanh(cur @ layer["w_xh"] + (r * hidden) @ layer["w_hh"] + layer["b_h"])
        cur = (1.0 - z) * h_tilde + z * hidden
    return cur @ params["w_hy"] + params["b_y"]


if __name__ == "__main__":
    input_size, hidden_size, output_size, num_layers = 16, 32, 8, 2
    batch = 8

    key = jax.random.PRNGKey(0)
    kx, kp = jax.random.split(key)
    x = jax.random.normal(kx, (batch, input_size), jnp.float32)
    params = init_params(kp, input_size, hidden_size, output_size, num_layers)

    out = gated_recurrent_forward(params, x)
    out = jax.block_until_ready(out)

    ref = reference_forward(params, x)
    assert out.shape == (batch, output_size)
    # bf16 MXU inputs -> looser tolerance vs the f32 reference (expected, not a bug).
    assert jnp.allclose(out, ref, atol=2e-2, rtol=2e-2), (
        float(jnp.max(jnp.abs(out - ref)))
    )

    print("KERNEL_OK")
</pallas_src>

<mosaic_0001>
module attributes {stable_mosaic.version = 11 : i64} {
  func.func @_fused_gru_kernel(%arg0: i32, %arg1: i32, %arg2: memref<8x128xf32, #tpu.memory_space<vmem>>, %arg3: memref<1x128x256xbf16, #tpu.memory_space<vmem>>, %arg4: memref<1x1x256xf32, #tpu.memory_space<vmem>>, %arg5: memref<128x128xbf16, #tpu.memory_space<vmem>>, %arg6: memref<1x128xf32, #tpu.memory_space<vmem>>, %arg7: memref<8x128xf32, #tpu.memory_space<vmem>>, %arg8: memref<8x128xf32, #tpu.memory_space<vmem>>) attributes {dimension_semantics = [#tpu.dimension_semantics<parallel>, #tpu.dimension_semantics<arbitrary>], iteration_bounds = array<i64: 1, 2>, scalar_prefetch = 0 : i64, scratch_operands = 1 : i64, tpu.core_type = #tpu.core_type<tc>, window_params = [{transform_indices = @transform_0, window_bounds = array<i64: 8, 128>}, {transform_indices = @transform_1, window_bounds = array<i64: 1, 128, 256>}, {transform_indices = @transform_2, window_bounds = array<i64: 1, 1, 256>}, {pipeline_mode = #tpu.pipeline_mode<synchronous>, transform_indices = @transform_3, window_bounds = array<i64: 128, 128>}, {pipeline_mode = #tpu.pipeline_mode<synchronous>, transform_indices = @transform_4, window_bounds = array<i64: 1, 128>}, {transform_indices = @transform_5, window_bounds = array<i64: 8, 128>}]} {
    %c0_i32 = arith.constant 0 : i32
    %0 = arith.cmpi eq, %arg1, %c0_i32 : i32
    %1 = arith.extui %0 : i1 to i32
    %c0_i32_0 = arith.constant 0 : i32
    %2 = arith.cmpi ne, %1, %c0_i32_0 : i32
    scf.if %2 {
      %c0_13 = arith.constant 0 : index
      %c0_14 = arith.constant 0 : index
      %27 = vector.load %arg2[%c0_13, %c0_14] : memref<8x128xf32, #tpu.memory_space<vmem>>, vector<8x128xf32>
      %c0_15 = arith.constant 0 : index
      %c0_16 = arith.constant 0 : index
      %28 = vector.load %arg8[%c0_15, %c0_16] : memref<8x128xf32, #tpu.memory_space<vmem>>, vector<8x128xf32>
      tpu.vector_store %arg8[%c0_15, %c0_16], %27 {strides = array<i32>} : memref<8x128xf32, #tpu.memory_space<vmem>>, vector<8x128xf32>,
    } else {
    }
    %c0 = arith.constant 0 : index
    %c0_1 = arith.constant 0 : index
    %3 = vector.load %arg8[%c0, %c0_1] : memref<8x128xf32, #tpu.memory_space<vmem>>, vector<8x128xf32>
    %4 = arith.truncf %3 : vector<8x128xf32> to vector<8x128xbf16>
    %c0_2 = arith.constant 0 : index
    %c0_3 = arith.constant 0 : index
    %c0_4 = arith.constant 0 : index
    %5 = vector.load %arg3[%c0_2, %c0_3, %c0_4] : memref<1x128x256xbf16, #tpu.memory_space<vmem>>, vector<1x128x256xbf16>
    %6 = vector.shape_cast %5 : vector<1x128x256xbf16> to vector<128x256xbf16>
    %cst = arith.constant dense<0.000000e+00> : vector<8x256xf32>
    %7 = tpu.matmul %4, %6, %cst {dimension_numbers = #tpu.dot_dimension_numbers<[1], [0], [0], [1], [0, 0, 1, 1], [], []>} : vector<8x128xbf16>, vector<128x256xbf16>, vector<8x256xf32> -> vector<8x256xf32>
    %c0_5 = arith.constant 0 : index
    %c0_6 = arith.constant 0 : index
    %c0_7 = arith.constant 0 : index
    %8 = vector.load %arg4[%c0_5, %c0_6, %c0_7] : memref<1x1x256xf32, #tpu.memory_space<vmem>>, vector<1x1x256xf32>
    %9 = vector.shape_cast %8 : vector<1x1x256xf32> to vector<1x256xf32>
    %10 = vector.broadcast %9 : vector<1x256xf32> to vector<8x256xf32>
    %11 = arith.addf %7, %10 : vector<8x256xf32>
    %12 = vector.extract_strided_slice %11 {offsets = [0, 0], sizes = [8, 128], strides = [1, 1]} : vector<8x256xf32> to vector<8x128xf32>
    %13 = vector.extract_strided_slice %11 {offsets = [0, 128], sizes = [8, 128], strides = [1, 1]} : vector<8x256xf32> to vector<8x128xf32>
    %cst_8 = arith.constant 0.000000e+00 : f32
    %14 = vector.broadcast %cst_8 : f32 to vector<8x128xf32>
    %15 = arith.subf %14, %12 : vector<8x128xf32>
    %16 = arith.negf %15 : vector<8x128xf32>
    %17 = math.exp %16 : vector<8x128xf32>
    %cst_9 = arith.constant 1.000000e+00 : f32
    %18 = vector.broadcast %cst_9 : f32 to vector<8x128xf32>
    %19 = arith.addf %18, %17 : vector<8x128xf32>
    %20 = arith.divf %18, %19 : vector<8x128xf32>
    %21 = math.tanh %13 : vector<8x128xf32>
    %22 = arith.mulf %20, %21 : vector<8x128xf32>
    %c0_10 = arith.constant 0 : index
    %c0_11 = arith.constant 0 : index
    %23 = vector.load %arg8[%c0_10, %c0_11] : memref<8x128xf32, #tpu.memory_space<vmem>>, vector<8x128xf32>
    tpu.vector_store %arg8[%c0_10, %c0_11], %22 {strides = array<i32>} : memref<8x128xf32, #tpu.memory_space<vmem>>, vector<8x128xf32>,
    %c1_i32 = arith.constant 1 : i32
    %24 = arith.cmpi eq, %arg1, %c1_i32 : i32
    %25 = arith.extui %24 : i1 to i32
    %c0_i32_12 = arith.constant 0 : i32
    %26 = arith.cmpi ne, %25, %c0_i32_12 : i32
    scf.if %26 {
      %27 = arith.truncf %22 : vector<8x128xf32> to vector<8x128xbf16>
      %c0_13 = arith.constant 0 : index
      %c0_14 = arith.constant 0 : index
      %28 = vector.load %arg5[%c0_13, %c0_14] : memref<128x128xbf16, #tpu.memory_space<vmem>>, vector<128x128xbf16>
      %cst_15 = arith.constant dense<0.000000e+00> : vector<8x128xf32>
      %29 = tpu.matmul %27, %28, %cst_15 {dimension_numbers = #tpu.dot_dimension_numbers<[1], [0], [0], [1], [0, 0, 1, 1], [], []>} : vector<8x128xbf16>, vector<128x128xbf16>, vector<8x128xf32> -> vector<8x128xf32>
      %c0_16 = arith.constant 0 : index
      %c0_17 = arith.constant 0 : index
      %30 = vector.load %arg6[%c0_16, %c0_17] : memref<1x128xf32, #tpu.memory_space<vmem>>, vector<1x128xf32>
      %31 = vector.broadcast %30 : vector<1x128xf32> to vector<8x128xf32>
      %32 = arith.addf %29, %31 : vector<8x128xf32>
      %c0_18 = arith.constant 0 : index
      %c0_19 = arith.constant 0 : index
      %33 = vector.load %arg7[%c0_18, %c0_19] : memref<8x128xf32, #tpu.memory_space<vmem>>, vector<8x128xf32>
      tpu.vector_store %arg7[%c0_18, %c0_19], %32 {strides = array<i32>} : memref<8x128xf32, #tpu.memory_space<vmem>>, vector<8x128xf32>,
    } else {
    }
    return
  }
  func.func @transform_0(%arg0: i32, %arg1: i32) -> (i32, i32) {
    %c0_i32 = arith.constant 0 : i32
    %c0_i32_0 = arith.constant 0 : i32
    return %arg0, %c0_i32 : i32, i32
  }
  func.func @transform_1(%arg0: i32, %arg1: i32) -> (i32, i32, i32) {
    %c0_i32 = arith.constant 0 : i32
    %c0_i32_0 = arith.constant 0 : i32
    %c0_i32_1 = arith.constant 0 : i32
    return %arg1, %c0_i32, %c0_i32_0 : i32, i32, i32
  }
  func.func @transform_2(%arg0: i32, %arg1: i32) -> (i32, i32, i32) {
    %c0_i32 = arith.constant 0 : i32
    %c0_i32_0 = arith.constant 0 : i32
    %c0_i32_1 = arith.constant 0 : i32
    return %arg1, %c0_i32, %c0_i32_0 : i32, i32, i32
  }
  func.func @transform_3(%arg0: i32, %arg1: i32) -> (i32, i32) {
    %c0_i32 = arith.constant 0 : i32
    %c0_i32_0 = arith.constant 0 : i32
    %c0_i32_1 = arith.constant 0 : i32
    return %c0_i32, %c0_i32_0 : i32, i32
  }
  func.func @transform_4(%arg0: i32, %arg1: i32) -> (i32, i32) {
    %c0_i32 = arith.constant 0 : i32
    %c0_i32_0 = arith.constant 0 : i32
    %c0_i32_1 = arith.constant 0 : i32
    return %c0_i32, %c0_i32_0 : i32, i32
  }
  func.func @transform_5(%arg0: i32, %arg1: i32) -> (i32, i32) {
    %c0_i32 = arith.constant 0 : i32
    %c0_i32_0 = arith.constant 0 : i32
    return %arg0, %c0_i32 : i32, i32
  }
}

</mosaic_0001>

<llo_original>
// kernel: tpu_custom_call.1
$region0: #{tpu_custom_call.1}
  #allocation0 [shape = 'u32[]', space=smem, size = 0x4, offset = 0x4, fixed_abs, tag = 'smem constant byte address 0x4 - core index']
  #allocation1 [shape = 'u32[144,128]{1,0:T(1,128)}', space=vmem, size = 0x12000, scoped, tag = 'internal scratch']
  #allocation2 [shape = 'f32[8,128]{1,0:T(8,128)}', space=vmem, size = 0x1000, scoped, tag = 'scratch operand']
  %s0 = inlined_call_operand.hbm [shape: f32[8,128], index: 0, kind: input, shape index: {}]
  %s1 = inlined_call_operand.hbm [shape: bf16[2,128,256], index: 1, kind: input, shape index: {}]
  %s2 = inlined_call_operand.hbm [shape: f32[2,1,256], index: 2, kind: input, shape index: {}]
  %s3 = inlined_call_operand.hbm [shape: bf16[128,128], index: 3, kind: input, shape index: {}]
  %s4 = inlined_call_operand.vmem [shape: f32[1,128], index: 4, kind: input, shape index: {}]
  %s5 = inlined_call_operand.hbm [shape: f32[8,128], index: 5, kind: output, shape index: {}]
  %s6 = sld [smem:[#allocation0]]
  $region77: #{tpu_custom_call.1} parent=0
    _
  %s8 = ssub.s32 1, %s6
  %s9 = scalar_select 0, %s8, %s6
  $region1: #{tpu_custom_call.1} parent=0
    #allocation3 [shape = 'u8[4096]{0}', space=vmem, size = 0x1000, scoped, tag = 'input window, operand 0, single buffered']
    #allocation4 [shape = 's32[2]{0}', space=sflag, size = 0x8, scoped, tag = 'scoped memory for tpu_custom_call.1']
    #allocation5 [shape = 's32[2]{0}', space=sflag, size = 0x8, scoped, tag = 'scoped memory for tpu_custom_call.1']
    #allocation6 [shape = 'u8[131072]{0}', space=vmem, size = 0x20000, scoped, tag = 'input window, operand 1']
    #allocation7 [shape = 's32[2]{0}', space=sflag, size = 0x8, scoped, tag = 'scoped memory for tpu_custom_call.1']
    #allocation8 [shape = 'u8[2048]{0}', space=vmem, size = 0x800, scoped, tag = 'input window, operand 2']
    #allocation9 [shape = 'u8[32768]{0}', space=vmem, size = 0x8000, scoped, tag = 'input window, operand 3, single buffered']
    #allocation10 [shape = 's32[1]{0}', space=sflag, size = 0x4, scoped, tag = 'scoped memory for tpu_custom_call.1']
    #allocation11 [shape = 'u8[4096]{0}', space=vmem, size = 0x1000, scoped, tag = 'output window, operand 0, single buffered']
    %10 = vsyncpa [#allocation4], 0
    %11 = vsyncpa [#allocation7], 0
    %s12 = scalar_lea.sflag [#allocation7], 1
    %13 = vsyncpa %s12, 0
    %14 = vsyncpa [#allocation10], 0
    %15 = vsyncpa [#allocation5], 0
    loop: start=0, step=1, limit=4
    $region2: #{tpu_custom_call.1} parent=1 // loop_pre_header
      _
    $region3: #{tpu_custom_call.1} parent=1 // loop_header
      %s17 = sphi 0, %s21
      %p18 = scmp.ge.s32.totalorder %s17, 4
      %s24 = sphi 0, %s36
      %s25 = sphi 0, %s32
      %s26 = sphi 0, %s24
      %s27 = sphi 0, %s25
      %s28 = sphi 0, %s26
      %s29 = sphi 0, %s27
      %s39 = sphi 0, %s41
      %s42 = sphi 0, %s39
      %s43 = sphi 0, %s42
      %s59 = sphi 0, %s43
      %s65 = sphi 0, %s67
      %s68 = sphi 0, %s65
      %s69 = sphi 0, %s68
      %s85 = sphi 0, %s69
      %s91 = sphi 0, %s93
      %s94 = sphi 0, %s91
      %s95 = sphi 0, %s94
      %s111 = sphi 0, %s95
      %s115 = sphi 0, %s115
      %s117 = sphi 0, %s115
      %s118 = sphi 0, %s117
      %s132 = sphi 0, %s118
      %s136 = sphi 0, %s136
      %s138 = sphi 0, %s136
      %s139 = sphi 0, %s138
      %s153 = sphi 0, %s139
      %s159 = sphi 0, %s161
      %s162 = sphi 0, %s159
      %s163 = sphi 0, %s162
      %s179 = sphi 0, %s163
    $region4: #{tpu_custom_call.1} parent=1 // loop_header_branch
      %20 = sbr.rel (%p18) target = $region8
    $region5: #{tpu_custom_call.1} parent=1 // loop_body
      %s22 = ssub.s32 %s17, 1
      %s23 = ssub.s32 %s17, 2
      %s30 = sadd.s32 1, %s25
      %p31 = scmp.ge.s32.totalorder %s30, 2
      %s32 = scalar_select %p31, 0, %s30
      %s33 = sadd.s32 1, %s24
      %s34 = scalar_select %p31, %s33, %s24
      %p35 = scmp.ge.s32.totalorder %s34, 1
      %s36 = scalar_select %p35, 0, %s34
      %s37 = ssub.s32 %s24, %s36
      %p38 = scmp.eq.s32.totalorder %s37, 0
      %s40 = sadd.s32 %s39, 1
      %s41 = scalar_select %p38, %s39, %s40
      %p44 = pneg %p38
      %p45 = scmp.eq.s32.totalorder %s17, 1
      %p46 = por %p44, %p45
      %p47 = scmp.ne.s32.totalorder %s39, %s42
      %p48 = scmp.eq.s32.totalorder %s17, 0
      %p49 = por %p47, %p48
      %p50 = scmp.ne.s32.totalorder %s39, %s42
      %p51 = scmp.eq.s32.totalorder %s22, 1
      %p52 = por %p50, %p51
      %p53 = scmp.ne.s32.totalorder %s42, %s43
      %p54 = scmp.eq.s32.totalorder %s22, 0
      %p55 = por %p53, %p54
      %p56 = scmp.ne.s32.totalorder %s42, %s43
      %p57 = scmp.eq.s32.totalorder %s23, 1
      %p58 = por %p56, %p57
      %p60 = scmp.ne.s32.totalorder %s43, %s59
      %p61 = scmp.eq.s32.totalorder %s23, 0
      %p62 = por %p60, %p61
      %s63 = ssub.s32 %s25, %s32
      %p64 = scmp.eq.s32.totalorder %s63, 0
      %s66 = sadd.s32 %s65, 1
      %s67 = scalar_select %p64, %s65, %s66
      %p70 = pneg %p64
      %p71 = scmp.eq.s32.totalorder %s17, 1
      %p72 = por %p70, %p71
      %p73 = scmp.ne.s32.totalorder %s65, %s68
      %p74 = scmp.eq.s32.totalorder %s17, 0
      %p75 = por %p73, %p74
      %p76 = scmp.ne.s32.totalorder %s65, %s68
      %p77 = scmp.eq.s32.totalorder %s22, 1
      %p78 = por %p76, %p77
      %p79 = scmp.ne.s32.totalorder %s68, %s69
      %p80 = scmp.eq.s32.totalorder %s22, 0
      %p81 = por %p79, %p80
      %p82 = scmp.ne.s32.totalorder %s68, %s69
      %p83 = scmp.eq.s32.totalorder %s23, 1
      %p84 = por %p82, %p83
      %p86 = scmp.ne.s32.totalorder %s69, %s85
      %p87 = scmp.eq.s32.totalorder %s23, 0
      %p88 = por %p86, %p87
      %s89 = ssub.s32 %s25, %s32
      %p90 = scmp.eq.s32.totalorder %s89, 0
      %s92 = sadd.s32 %s91, 1
      %s93 = scalar_select %p90, %s91, %s92
      %p96 = pneg %p90
      %p97 = scmp.eq.s32.totalorder %s17, 1
      %p98 = por %p96, %p97
      %p99 = scmp.ne.s32.totalorder %s91, %s94
      %p100 = scmp.eq.s32.totalorder %s17, 0
      %p101 = por %p99, %p100
      %p102 = scmp.ne.s32.totalorder %s91, %s94
      %p103 = scmp.eq.s32.totalorder %s22, 1
      %p104 = por %p102, %p103
      %p105 = scmp.ne.s32.totalorder %s94, %s95
      %p106 = scmp.eq.s32.totalorder %s22, 0
      %p107 = por %p105, %p106
      %p108 = scmp.ne.s32.totalorder %s94, %s95
      %p109 = scmp.eq.s32.totalorder %s23, 1
      %p110 = por %p108, %p109
      %p112 = scmp.ne.s32.totalorder %s95, %s111
      %p113 = scmp.eq.s32.totalorder %s23, 0
      %p114 = por %p112, %p113
      %s116 = sadd.s32 %s115, 1
      %p119 = scmp.eq.s32.totalorder %s17, 1
      %p120 = scmp.ne.s32.totalorder %s115, %s117
      %p121 = scmp.eq.s32.totalorder %s17, 0
      %p122 = por %p120, %p121
      %p123 = scmp.ne.s32.totalorder %s115, %s117
      %p124 = scmp.eq.s32.totalorder %s22, 1
      %p125 = por %p123, %p124
      %p126 = scmp.ne.s32.totalorder %s117, %s118
      %p127 = scmp.eq.s32.totalorder %s22, 0
      %p128 = por %p126, %p127
      %p129 = scmp.ne.s32.totalorder %s117, %s118
      %p130 = scmp.eq.s32.totalorder %s23, 1
      %p131 = por %p129, %p130
      %p133 = scmp.ne.s32.totalorder %s118, %s132
      %p134 = scmp.eq.s32.totalorder %s23, 0
      %p135 = por %p133, %p134
      %s137 = sadd.s32 %s136, 1
      %p140 = scmp.eq.s32.totalorder %s17, 1
      %p141 = scmp.ne.s32.totalorder %s136, %s138
      %p142 = scmp.eq.s32.totalorder %s17, 0
      %p143 = por %p141, %p142
      %p144 = scmp.ne.s32.totalorder %s136, %s138
      %p145 = scmp.eq.s32.totalorder %s22, 1
      %p146 = por %p144, %p145
      %p147 = scmp.ne.s32.totalorder %s138, %s139
      %p148 = scmp.eq.s32.totalorder %s22, 0
      %p149 = por %p147, %p148
      %p150 = scmp.ne.s32.totalorder %s138, %s139
      %p151 = scmp.eq.s32.totalorder %s23, 1
      %p152 = por %p150, %p151
      %p154 = scmp.ne.s32.totalorder %s139, %s153
      %p155 = scmp.eq.s32.totalorder %s23, 0
      %p156 = por %p154, %p155
      %s157 = ssub.s32 %s24, %s36
      %p158 = scmp.eq.s32.totalorder %s157, 0
      %s160 = sadd.s32 %s159, 1
      %s161 = scalar_select %p158, %s159, %s160
      %p164 = pneg %p158
      %p165 = scmp.eq.s32.totalorder %s17, 1
      %p166 = por %p164, %p165
      %p167 = scmp.ne.s32.totalorder %s159, %s162
      %p168 = scmp.eq.s32.totalorder %s17, 0
      %p169 = por %p167, %p168
      %p170 = scmp.ne.s32.totalorder %s159, %s162
      %p171 = scmp.eq.s32.totalorder %s22, 1
      %p172 = por %p170, %p171
      %p173 = scmp.ne.s32.totalorder %s162, %s163
      %p174 = scmp.eq.s32.totalorder %s22, 0
      %p175 = por %p173, %p174
      %p176 = scmp.ne.s32.totalorder %s162, %s163
      %p177 = scmp.eq.s32.totalorder %s23, 1
      %p178 = por %p176, %p177
      %p180 = scmp.ne.s32.totalorder %s163, %s179
      %p181 = scmp.eq.s32.totalorder %s23, 0
      %p182 = por %p180, %p181
      %p183 = scmp.le.s32.totalorder 1, %s17
      %p184 = scmp.lt.s32.totalorder %s17, 3
      %p185 = pnand %p183, %p184
      %p186 = pneg %p185
      // Predicated region
      $region9: #{tpu_custom_call.1} parent=5 // pred_check
        _
      $region10: #{tpu_custom_call.1} parent=5 // pred_check_branch
        %188 = sbr.rel (%p185) target = $region12
      $region11: #{tpu_custom_call.1} parent=5 // pred_region
        %s189 = ssub.s32 %s17, 1
        // Predicated region
        $region13: #{tpu_custom_call.1} parent=11 // pred_check
          %p190 = pneg %p55
        $region14: #{tpu_custom_call.1} parent=11 // pred_check_branch
          %192 = sbr.rel (%p190) target = $region16
        $region15: #{tpu_custom_call.1} parent=11 // pred_region
          %s194 = ssub.s32 128, 128
          %195 = vsyncadd [#allocation4], %s194
          %s196 = smul.addr %s26, 128
          %s197 = scalar_lea.hbm %s0, %s196
          %s199 = sshll.u32 [#allocation3], 4
          %s200 = int_to_ptr.vmem [resolvable:$true] %s199
          %202 = dma.hbm_to_vmem [thread:$0]  %s197, 128, %s200, [#allocation4]
        $region16: #{tpu_custom_call.1} parent=11 // pred_fallthru
          _
        // Predicated region
        $region17: #{tpu_custom_call.1} parent=11 // pred_check
          %p203 = pneg %p128
        $region18: #{tpu_custom_call.1} parent=11 // pred_check_branch
          %205 = sbr.rel (%p203) target = $region20
        $region19: #{tpu_custom_call.1} parent=11 // pred_region
          %s207 = ssub.s32 1024, 1024
          %208 = vsyncadd [#allocation10], %s207
          %s209 = sshll.u32 [#allocation9], 4
          %s210 = int_to_ptr.vmem [resolvable:$true] %s209
          %215 = dma.hbm_to_vmem [thread:$0]  %s3, 1024, %s210, [#allocation10], 64, 64, 4
        $region20: #{tpu_custom_call.1} parent=11 // pred_fallthru
          _
        // Predicated region
        $region21: #{tpu_custom_call.1} parent=11 // pred_check
          %p216 = pneg %p149
        $region22: #{tpu_custom_call.1} parent=11 // pred_check_branch
          %218 = sbr.rel (%p216) target = $region24
        $region23: #{tpu_custom_call.1} parent=11 // pred_region
          _
        $region24: #{tpu_custom_call.1} parent=11 // pred_fallthru
          _
      $region12: #{tpu_custom_call.1} parent=5 // pred_fallthru
        _
      %p219 = scmp.lt.s32.totalorder %s17, 2
      // Predicated region
      $region25: #{tpu_custom_call.1} parent=5 // pred_check
        %p220 = pneg %p219
      $region26: #{tpu_custom_call.1} parent=5 // pred_check_branch
        %222 = sbr.rel (%p220) target = $region28
      $region27: #{tpu_custom_call.1} parent=5 // pred_region
        // Predicated region
        $region29: #{tpu_custom_call.1} parent=27 // pred_check
          %p223 = pneg %p75
        $region30: #{tpu_custom_call.1} parent=27 // pred_check_branch
          %225 = sbr.rel (%p223) target = $region32
        $region31: #{tpu_custom_call.1} parent=27 // pred_region
          %s226 = sand.u32 %s17, 1
          %s227 = scalar_lea.sflag [#allocation7], %s226
          %s228 = sand.u32 %s65, 1
          %s229 = smul.addr %s228, 128
          %s230 = scalar_lea.vmem [#allocation6], %s229
          %s232 = ssub.s32 2048, 2048
          %233 = vsyncadd %s227, %s232
          %s234 = smul.addr %s25, 32
          %s235 = smul.addr %s234, 64
          %s236 = scalar_lea.hbm %s1, %s235
          %s237 = sshll.u32 %s230, 4
          %s238 = int_to_ptr.vmem [resolvable:$true] %s237
          %243 = dma.hbm_to_vmem [thread:$0]  %s236, 2048, %s238, %s227, 128, 128, 8
        $region32: #{tpu_custom_call.1} parent=27 // pred_fallthru
          _
        // Predicated region
        $region33: #{tpu_custom_call.1} parent=27 // pred_check
          %p244 = pneg %p101
        $region34: #{tpu_custom_call.1} parent=27 // pred_check_branch
          %246 = sbr.rel (%p244) target = $region36
        $region35: #{tpu_custom_call.1} parent=27 // pred_region
          %s247 = sand.u32 %s17, 1
          %s248 = scalar_lea.sflag [#allocation7], %s247
          %s249 = sand.u32 %s91, 1
          %s250 = smul.addr %s249, 2
          %s251 = scalar_lea.vmem [#allocation8], %s250
          %s253 = ssub.s32 32, 32
          %254 = vsyncadd %s248, %s253
          %s255 = smul.addr %s25, 2
          %s256 = smul.addr %s255, 16
          %s257 = scalar_lea.hbm %s2, %s256
          %s259 = sshll.u32 %s251, 4
          %s260 = int_to_ptr.vmem [resolvable:$true] %s259
          %262 = dma.hbm_to_vmem [thread:$0]  %s257, 32, %s260, %s248
        $region36: #{tpu_custom_call.1} parent=27 // pred_fallthru
          _
      $region28: #{tpu_custom_call.1} parent=5 // pred_fallthru
        _
      %p263 = scmp.le.s32.totalorder 1, %s17
      %p264 = scmp.lt.s32.totalorder %s17, 3
      %p265 = pnand %p263, %p264
      %p266 = pneg %p265
      // Predicated region
      $region37: #{tpu_custom_call.1} parent=5 // pred_check
        _
      $region38: #{tpu_custom_call.1} parent=5 // pred_check_branch
        %268 = sbr.rel (%p265) target = $region40
      $region39: #{tpu_custom_call.1} parent=5 // pred_region
        %s269 = ssub.s32 %s17, 1
        // Predicated region
        $region41: #{tpu_custom_call.1} parent=39 // pred_check
          %p270 = pneg %p55
        $region42: #{tpu_custom_call.1} parent=39 // pred_check_branch
          %272 = sbr.rel (%p270) target = $region44
        $region43: #{tpu_custom_call.1} parent=39 // pred_region
          %273 = dma.done [#allocation4], 128
        $region44: #{tpu_custom_call.1} parent=39 // pred_fallthru
          _
        %s274 = sand.u32 %s22, 1
        %s275 = scalar_lea.sflag [#allocation7], %s274
        %s276 = sand.u32 %s68, 1
        %s277 = smul.addr %s276, 128
        %s278 = scalar_lea.vmem [#allocation6], %s277
        // Predicated region
        $region45: #{tpu_custom_call.1} parent=39 // pred_check
          %p279 = pneg %p81
        $region46: #{tpu_custom_call.1} parent=39 // pred_check_branch
          %281 = sbr.rel (%p279) target = $region48
        $region47: #{tpu_custom_call.1} parent=39 // pred_region
          %282 = dma.done %s275, 2048
        $region48: #{tpu_custom_call.1} parent=39 // pred_fallthru
          _
        %s283 = sand.u32 %s22, 1
        %s284 = scalar_lea.sflag [#allocation7], %s283
        %s285 = sand.u32 %s94, 1
        %s286 = smul.addr %s285, 2
        %s287 = scalar_lea.vmem [#allocation8], %s286
        // Predicated region
        $region49: #{tpu_custom_call.1} parent=39 // pred_check
          %p288 = pneg %p107
        $region50: #{tpu_custom_call.1} parent=39 // pred_check_branch
          %290 = sbr.rel (%p288) target = $region52
        $region51: #{tpu_custom_call.1} parent=39 // pred_region
          %291 = dma.done %s284, 32
        $region52: #{tpu_custom_call.1} parent=39 // pred_fallthru
          _
        // Predicated region
        $region53: #{tpu_custom_call.1} parent=39 // pred_check
          %p292 = pneg %p128
        $region54: #{tpu_custom_call.1} parent=39 // pred_check_branch
          %294 = sbr.rel (%p292) target = $region56
        $region55: #{tpu_custom_call.1} parent=39 // pred_region
          %295 = dma.done [#allocation10], 1024
        $region56: #{tpu_custom_call.1} parent=39 // pred_fallthru
          _
        %p296 = pneg %p55
        %p297 = pneg %p52
        %s298 = sand.u32 %s22, 1
        %s299 = scalar_lea.sflag [#allocation7], %s298
        %s300 = sand.u32 %s68, 1
        %s301 = smul.addr %s300, 128
        %s302 = scalar_lea.vmem [#allocation6], %s301
        %p303 = pneg %p81
        %p304 = pneg %p78
        %s305 = sand.u32 %s22, 1
        %s306 = scalar_lea.sflag [#allocation7], %s305
        %s307 = sand.u32 %s94, 1
        %s308 = smul.addr %s307, 2
        %s309 = scalar_lea.vmem [#allocation8], %s308
        %p310 = pneg %p107
        %p311 = pneg %p104
        %p312 = pneg %p128
        %p313 = pneg %p125
        %p314 = pneg %p149
        %p315 = pneg %p146
        %p316 = pneg %p175
        %p317 = pneg %p172
        %p319 = scmp.eq.s32.totalorder %s27, 0
        // Predicated region
        $region57: #{tpu_custom_call.1} parent=39 // pred_check
          %p320 = pneg %p319
        $region58: #{tpu_custom_call.1} parent=39 // pred_check_branch
          %322 = sbr.rel (%p320) target = $region60
        $region59: #{tpu_custom_call.1} parent=39 // pred_region
          %v323 = vld [vmem:[#allocation3] sm:$0xff]
          %324 = vst [vmem:[#allocation2] sm:$0xff] %v323
        $region60: #{tpu_custom_call.1} parent=39 // pred_fallthru
          _
        %v325 = vld [vmem:[#allocation2] sm:$0xff]
        %v326 = vpack.c.bf16 %v325, %v325
        %v327 = vld [vmem:[%s278] sm:$0xff]
        %v328 = vld [vmem:[%s278 + $0x8] sm:$0xff]
        %v329 = vld [vmem:[%s278 + $0x10] sm:$0xff]
        %v330 = vld [vmem:[%s278 + $0x18] sm:$0xff]
        %v331 = vld [vmem:[%s278 + $0x20] sm:$0xff]
        %v332 = vld [vmem:[%s278 + $0x28] sm:$0xff]
        %v333 = vld [vmem:[%s278 + $0x30] sm:$0xff]
        %v334 = vld [vmem:[%s278 + $0x38] sm:$0xff]
        %v335 = vld [vmem:[%s278 + $0x40] sm:$0xff]
        %v336 = vld [vmem:[%s278 + $0x48] sm:$0xff]
        %v337 = vld [vmem:[%s278 + $0x50] sm:$0xff]
        %v338 = vld [vmem:[%s278 + $0x58] sm:$0xff]
        %v339 = vld [vmem:[%s278 + $0x60] sm:$0xff]
        %v340 = vld [vmem:[%s278 + $0x68] sm:$0xff]
        %v341 = vld [vmem:[%s278 + $0x70] sm:$0xff]
        %v342 = vld [vmem:[%s278 + $0x78] sm:$0xff]
        %v343 = vld [vmem:[%s287] sm:$0x3]
        %v345 = vlaneseq
        %v346 = vshrl.u32 %v345, 7
        %v347 = vsub.s32 0, %v346
        %v348 = vrot.slane %v343, %v347
        %v349 = vlaneseq
        %v350 = vshrl.u32 %v349, 7
        %v351 = vsub.s32 1, %v350
        %v352 = vrot.slane %v343, %v351
        %v371 = vunpack.c.l.b16 %v327
        %v372 = vunpack.c.h.b16 %v327
        %v373 = vunpack.c.l.b16 %v328
        %v374 = vunpack.c.h.b16 %v328
        %v375 = vunpack.c.l.b16 %v329
        %v376 = vunpack.c.h.b16 %v329
        %v377 = vunpack.c.l.b16 %v330
        %v378 = vunpack.c.h.b16 %v330
        %v379 = vunpack.c.l.b16 %v331
        %v380 = vunpack.c.h.b16 %v331
        %v381 = vunpack.c.l.b16 %v332
        %v382 = vunpack.c.h.b16 %v332
        %v383 = vunpack.c.l.b16 %v333
        %v384 = vunpack.c.h.b16 %v333
        %v385 = vunpack.c.l.b16 %v334
        %v386 = vunpack.c.h.b16 %v334
        %v387 = vunpack.c.l.b16 %v335
        %v388 = vunpack.c.h.b16 %v335
        %v389 = vunpack.c.l.b16 %v336
        %v390 = vunpack.c.h.b16 %v336
        %v391 = vunpack.c.l.b16 %v337
        %v392 = vunpack.c.h.b16 %v337
        %v393 = vunpack.c.l.b16 %v338
        %v394 = vunpack.c.h.b16 %v338
        %v395 = vunpack.c.l.b16 %v339
        %v396 = vunpack.c.h.b16 %v339
        %v397 = vunpack.c.l.b16 %v340
        %v398 = vunpack.c.h.b16 %v340
        %v399 = vunpack.c.l.b16 %v341
        %v400 = vunpack.c.h.b16 %v341
        %v401 = vunpack.c.l.b16 %v342
        %v402 = vunpack.c.h.b16 %v342
        %v403 = vpack.c.b16 %v373, %v371
        %v404 = vpack.c.b16 %v374, %v372
        %v405 = vpack.c.b16 %v377, %v375
        %v406 = vpack.c.b16 %v378, %v376
        %v407 = vpack.c.b16 %v381, %v379
        %v408 = vpack.c.b16 %v382, %v380
        %v409 = vpack.c.b16 %v385, %v383
        %v410 = vpack.c.b16 %v386, %v384
        %v411 = vpack.c.b16 %v389, %v387
        %v412 = vpack.c.b16 %v390, %v388
        %v413 = vpack.c.b16 %v393, %v391
        %v414 = vpack.c.b16 %v394, %v392
        %v415 = vpack.c.b16 %v397, %v395
        %v416 = vpack.c.b16 %v398, %v396
        %v417 = vpack.c.b16 %v401, %v399
        %v418 = vpack.c.b16 %v402, %v400
        %435 = vmatprep.subr.bf16.mxu0 %v418
        %436 = vmatpush1.bf16.msra.mxu0 %v417
        %437 = vmatprep.subr.bf16.mxu0 %v416
        %438 = vmatpush1.bf16.msra.mxu0 %v415
        %439 = vmatprep.subr.bf16.mxu0 %v414
        %440 = vmatpush1.bf16.msra.mxu0 %v413
        %441 = vmatprep.subr.bf16.mxu0 %v412
        %442 = vmatpush1.bf16.msra.mxu0 %v411
        %443 = vmatprep.subr.bf16.mxu0 %v410
        %444 = vmatpush1.bf16.msra.mxu0 %v409
        %445 = vmatprep.subr.bf16.mxu0 %v408
        %446 = vmatpush1.bf16.msra.mxu0 %v407
        %447 = vmatprep.subr.bf16.mxu0 %v406
        %448 = vmatpush1.bf16.msra.mxu0 %v405
        %449 = vmatprep.subr.bf16.mxu0 %v404
        %450 = vmatpush1.bf16.msra.mxu0 %v403
        %451 = vmatprep.subr.bf16.mxu0 0
        %452 = vmatpush2.bf16.msra.mxu0 0
        %453 = vmatprep.subr.bf16.mxu0 0
        %454 = vmatpush2.bf16.msra.mxu0 0
        %455 = vmatprep.subr.bf16.mxu0 0
        %456 = vmatpush2.bf16.msra.mxu0 0
        %457 = vmatprep.subr.bf16.mxu0 0
        %458 = vmatpush2.bf16.msra.mxu0 0
        %459 = vmatprep.subr.bf16.mxu0 0
        %460 = vmatpush2.bf16.msra.mxu0 0
        %461 = vmatprep.subr.bf16.mxu0 0
        %462 = vmatpush2.bf16.msra.mxu0 0
        %463 = vmatprep.subr.bf16.mxu0 0
        %464 = vmatpush2.bf16.msra.mxu0 0
        %465 = vmatprep.subr.bf16.mxu0 0
        %466 = vmatpush2.bf16.msra.mxu0 0
        %467 = vmatprep.mubr.bf16.mxu0 0
        %468 = vmatmul.mubr.bf16.gmra.mxu0 %v326
        %v469 = vpop.f32.mrf.mxu0
        %v470 = vadd.f32 %v348, %v469
        %v471 = vpop.f32.mrf.mxu0
        %v472 = vadd.f32 %v352, %v471
        %v473 = vpop.f32.mrf.mxu0
        %v474 = vpop.f32.mrf.mxu0
        %475 = vdwg.mxu0
        %v476 = vsub.f32 0.0, %v470
        %v477 = vxor.u32 %v476, 2147483648
        %v478 = vmul.f32 %v477, 1.442695
        %v479 = vpow.pop %v478
        %v480 = vadd.f32 %v479, 1.0
        %v481 = vrcp.pop %v480
        %v482 = vmul.f32 1.0, %v481
        %v483 = vtanh.pop %v472
        %v484 = vmul.f32 %v482, %v483
        %485 = vst [vmem:[#allocation2] sm:$0xff] %v484
        %p486 = scmp.eq.s32.totalorder %s27, 1
        // Predicated region
        $region61: #{tpu_custom_call.1} parent=39 // pred_check
          %p487 = pneg %p486
        $region62: #{tpu_custom_call.1} parent=39 // pred_check_branch
          %489 = sbr.rel (%p487) target = $region64
        $region63: #{tpu_custom_call.1} parent=39 // pred_region
          %v490 = vpack.c.bf16 %v484, %v484
          %v491 = vld [vmem:[#allocation9] sm:$0xf]
          %v492 = vld [vmem:[#allocation9 + $0x4] sm:$0xf]
          %v493 = vld [vmem:[#allocation9 + $0x8] sm:$0xf]
          %v494 = vld [vmem:[#allocation9 + $0xc] sm:$0xf]
          %v495 = vld [vmem:[#allocation9 + $0x10] sm:$0xf]
          %v496 = vld [vmem:[#allocation9 + $0x14] sm:$0xf]
          %v497 = vld [vmem:[#allocation9 + $0x18] sm:$0xf]
          %v498 = vld [vmem:[#allocation9 + $0x1c] sm:$0xf]
          %v499 = vld [vmem:[#allocation9 + $0x20] sm:$0xf]
          %v500 = vld [vmem:[#allocation9 + $0x24] sm:$0xf]
          %v501 = vld [vmem:[#allocation9 + $0x28] sm:$0xf]
          %v502 = vld [vmem:[#allocation9 + $0x2c] sm:$0xf]
          %v503 = vld [vmem:[#allocation9 + $0x30] sm:$0xf]
          %v504 = vld [vmem:[#allocation9 + $0x34] sm:$0xf]
          %v505 = vld [vmem:[#allocation9 + $0x38] sm:$0xf]
          %v506 = vld [vmem:[#allocation9 + $0x3c] sm:$0xf]
          %v507 = vld [vmem:[%s4] sm:$0x1]
          %v509 = vlaneseq
          %v510 = vshrl.u32 %v509, 7
          %v511 = vsub.s32 0, %v510
          %v512 = vrot.slane %v507, %v511
          %v530 = vunpack.c.l.b16 %v491
          %v531 = vunpack.c.l.b16 %v492
          %v532 = vunpack.c.l.b16 %v493
          %v533 = vunpack.c.l.b16 %v494
          %v534 = vunpack.c.l.b16 %v495
          %v535 = vunpack.c.l.b16 %v496
          %v536 = vunpack.c.l.b16 %v497
          %v537 = vunpack.c.l.b16 %v498
          %v538 = vunpack.c.l.b16 %v499
          %v539 = vunpack.c.l.b16 %v500
          %v540 = vunpack.c.l.b16 %v501
          %v541 = vunpack.c.l.b16 %v502
          %v542 = vunpack.c.l.b16 %v503
          %v543 = vunpack.c.l.b16 %v504
          %v544 = vunpack.c.l.b16 %v505
          %v545 = vunpack.c.l.b16 %v506
          %v546 = vpack.c.b16 %v531, %v530
          %v547 = vpack.c.b16 %v533, %v532
          %v548 = vpack.c.b16 %v535, %v534
          %v549 = vpack.c.b16 %v537, %v536
          %v550 = vpack.c.b16 %v539, %v538
          %v551 = vpack.c.b16 %v541, %v540
          %v552 = vpack.c.b16 %v543, %v542
          %v553 = vpack.c.b16 %v545, %v544
          %562 = vmatprep.subr.bf16.mxu0 0
          %563 = vmatpush1.bf16.msra.mxu0 %v553
          %564 = vmatprep.subr.bf16.mxu0 0
          %565 = vmatpush1.bf16.msra.mxu0 %v552
          %566 = vmatprep.subr.bf16.mxu0 0
          %567 = vmatpush1.bf16.msra.mxu0 %v551
          %568 = vmatprep.subr.bf16.mxu0 0
          %569 = vmatpush1.bf16.msra.mxu0 %v550
          %570 = vmatprep.subr.bf16.mxu0 0
          %571 = vmatpush1.bf16.msra.mxu0 %v549
          %572 = vmatprep.subr.bf16.mxu0 0
          %573 = vmatpush1.bf16.msra.mxu0 %v548
          %574 = vmatprep.subr.bf16.mxu0 0
          %575 = vmatpush1.bf16.msra.mxu0 %v547
          %576 = vmatprep.subr.bf16.mxu0 0
          %577 = vmatpush1.bf16.msra.mxu0 %v546
          %578 = vmatprep.subr.bf16.mxu0 0
          %579 = vmatpush2.bf16.msra.mxu0 0
          %580 = vmatprep.subr.bf16.mxu0 0
          %581 = vmatpush2.bf16.msra.mxu0 0
          %582 = vmatprep.subr.bf16.mxu0 0
          %583 = vmatpush2.bf16.msra.mxu0 0
          %584 = vmatprep.subr.bf16.mxu0 0
          %585 = vmatpush2.bf16.msra.mxu0 0
          %586 = vmatprep.subr.bf16.mxu0 0
          %587 = vmatpush2.bf16.msra.mxu0 0
          %588 = vmatprep.subr.bf16.mxu0 0
          %589 = vmatpush2.bf16.msra.mxu0 0
          %590 = vmatprep.subr.bf16.mxu0 0
          %591 = vmatpush2.bf16.msra.mxu0 0
          %592 = vmatprep.subr.bf16.mxu0 0
          %593 = vmatpush2.bf16.msra.mxu0 0
          %594 = vmatprep.mubr.bf16.mxu0 0
          %595 = vmatmul.mubr.bf16.gmra.mxu0 %v490
          %v596 = vpop.f32.mrf.mxu0
          %v597 = vadd.f32 %v512, %v596
          %v598 = vpop.f32.mrf.mxu0
          %v599 = vpop.f32.mrf.mxu0
          %v600 = vpop.f32.mrf.mxu0
          %601 = vdwg.mxu0
          %602 = vst [vmem:[#allocation11] sm:$0xff] %v597
        $region64: #{tpu_custom_call.1} parent=39 // pred_fallthru
          _
        // Predicated region
        $region65: #{tpu_custom_call.1} parent=39 // pred_check
          %p603 = pneg %p172
        $region66: #{tpu_custom_call.1} parent=39 // pred_check_branch
          %605 = sbr.rel (%p603) target = $region68
        $region67: #{tpu_custom_call.1} parent=39 // pred_region
          %s607 = ssub.s32 128, 128
          %608 = vsyncadd [#allocation5], %s607
          %s609 = smul.addr %s26, 128
          %s610 = scalar_lea.hbm %s5, %s609
          %s612 = sshll.u32 [#allocation11], 4
          %s613 = int_to_ptr.vmem [resolvable:$true] %s612
          %615 = dma.vmem_to_hbm [thread:$0]  %s613, 128, %s610, [#allocation5]
        $region68: #{tpu_custom_call.1} parent=39 // pred_fallthru
          _
        // Predicated region
        $region69: #{tpu_custom_call.1} parent=39 // pred_check
          %p616 = pneg %p172
        $region70: #{tpu_custom_call.1} parent=39 // pred_check_branch
          %618 = sbr.rel (%p616) target = $region72
        $region71: #{tpu_custom_call.1} parent=39 // pred_region
          %619 = dma.done [#allocation5], 128
        $region72: #{tpu_custom_call.1} parent=39 // pred_fallthru
          _
      $region40: #{tpu_custom_call.1} parent=5 // pred_fallthru
        _
      %p620 = scmp.le.s32.totalorder 2, %s17
      // Predicated region
      $region73: #{tpu_custom_call.1} parent=5 // pred_check
        %p621 = pneg %p620
      $region74: #{tpu_custom_call.1} parent=5 // pred_check_branch
        %623 = sbr.rel (%p621) target = $region76
      $region75: #{tpu_custom_call.1} parent=5 // pred_region
        %s624 = ssub.s32 %s17, 2
      $region76: #{tpu_custom_call.1} parent=5 // pred_fallthru
        _
    $region6: #{tpu_custom_call.1} parent=1 // loop_footer
      %s21 = sadd.s32 1, %s17
    $region7: #{tpu_custom_call.1} parent=1 // loop_footer_branch
      %16 = sbr.rel target = $region3
    $region8: #{tpu_custom_call.1} parent=1 // loop_exit
      _
    %625 = vsyncpa [#allocation4], 1
    %s626 = scalar_lea.sflag [#allocation4], 1
    %627 = vsyncpa %s626, 1
    %628 = vsyncpa [#allocation7], 1
    %s629 = scalar_lea.sflag [#allocation7], 1
    %630 = vsyncpa %s629, 1
    %631 = vsyncpa [#allocation10], 1
    %632 = vsyncpa [#allocation5], 1
    %s633 = scalar_lea.sflag [#allocation5], 1
    %634 = vsyncpa %s633, 1

</llo_original>
